<compile_context>
chip_gen: v6e
topology: v6e:2x2x1
jax: 0.10.0
libtpu: 0.0.40
codegen_flags: <defaults>
</compile_context>

<pallas_src>
import jax
import jax.numpy as jnp
from jax.experimental import pallas as pl
from jax.experimental.pallas import tpu as pltpu

_LANE = 128


def _round_up(x, m):
    return ((x + m - 1) // m) * m


def _fused_head_kernel(x_ref, w1_ref, b1_ref, w2_ref, b2_ref, o_ref):
    # relu(x @ W1cat + b1cat) @ W2blk + b2cat -- every level at once, entirely
    # in VMEM.  bf16 MXU inputs, f32 accumulation, f32 bias/relu/output.
    x = x_ref[...].astype(jnp.bfloat16)
    h = jnp.dot(x, w1_ref[...], preferred_element_type=jnp.float32)
    h = jnp.maximum(h + b1_ref[...], 0.0)
    o = jnp.dot(h.astype(jnp.bfloat16), w2_ref[...],
                preferred_element_type=jnp.float32)
    o_ref[...] = (o + b2_ref[...]).astype(o_ref.dtype)


def fused_hierarchical_head(x, w1, b1, w2, b2, *, max_bm=512):
    """One pallas_call for the whole hierarchical head.

    x  : (B, D)   f32
    w1 : (D, Hp)  bf16 concatenated (lane-padded) first-layer weights
    b1 : (1, Hp)  f32
    w2 : (Hp, Cp) bf16 block-diagonal (lane-padded) second-layer weights
    b2 : (1, Cp)  f32
    returns the (B, Cp) padded logits slab (caller slices per level).
    """
    B, D = x.shape
    Hp = w1.shape[1]
    Cp = w2.shape[1]

    # Batch tile: whole batch when small, otherwise up to max_bm rows.
    bm = min(max_bm, _round_up(B, 8))
    # v7x megacore: make sure the "parallel" batch axis has >= 2 steps when
    # there is enough work, so both TensorCores are used.
    if (B + bm - 1) // bm < 2 and B >= 256:
        bm = _round_up((B + 1) // 2, 8)
    grid = ((B + bm - 1) // bm,)

    out_itemsize = jnp.dtype(x.dtype).itemsize
    flops = 2 * B * D * Hp + 2 * B * Hp * Cp
    bytes_accessed = (x.size * out_itemsize
                      + w1.size * jnp.dtype(w1.dtype).itemsize
                      + w2.size * jnp.dtype(w2.dtype).itemsize
                      + (b1.size + b2.size + B * Cp) * 4)

    # Explicit scoped-VMEM budget: resident weights/biases (single-buffered)
    # + double-buffered x/out tiles + hidden temporaries, with ~25% headroom.
    vmem_need = (w1.size * jnp.dtype(w1.dtype).itemsize
                 + w2.size * jnp.dtype(w2.dtype).itemsize
                 + (b1.size + b2.size) * 4
                 + 2 * bm * D * out_itemsize        # x tiles (double-buffered)
                 + 2 * bm * Cp * out_itemsize       # out tiles (double-buffered)
                 + bm * Hp * (4 + 2))               # f32 hidden + bf16 copy
    vmem_limit = min(max(int(1.25 * vmem_need), 1 << 20), 96 * (1 << 20))

    # Weights/biases never change across grid steps: keep them whole-resident
    # in VMEM (single buffer) instead of running them through the pipeline.
    weight_specs = [pl.BlockSpec(memory_space=pltpu.MemorySpace.VMEM)
                    for _ in range(4)]

    return pl.pallas_call(
        _fused_head_kernel,
        out_shape=jax.ShapeDtypeStruct((B, Cp), x.dtype),
        grid_spec=pl.GridSpec(
            grid=grid,
            in_specs=[pl.BlockSpec((bm, D), lambda i: (i, 0))] + weight_specs,
            out_specs=pl.BlockSpec((bm, Cp), lambda i: (i, 0)),
        ),
        compiler_params=pltpu.CompilerParams(
            dimension_semantics=("parallel",),
            vmem_limit_bytes=vmem_limit),
        cost_estimate=pl.CostEstimate(
            flops=flops, transcendentals=0, bytes_accessed=bytes_accessed),
    )(x, w1, b1, w2, b2)


class HierarchicalClassifierHead:
    """JAX/Pallas port of the PyTorch module (forward + get_embedding)."""

    def __init__(self, input_dim, hierarchy_config, hidden_dim=128,
                 key=None, dtype=jnp.float32):
        if key is None:
            key = jax.random.PRNGKey(0)
        self.input_dim = input_dim
        self.hidden_dim = hidden_dim
        self.num_classes = [int(level["num_classes"]) for level in hierarchy_config]

        # Per-level parameters (reference copies, nn.Linear-style uniform init).
        self.params = []
        for nc in self.num_classes:
            key, k1, k2, k3, k4 = jax.random.split(key, 5)
            s1 = 1.0 / float(input_dim) ** 0.5
            s2 = 1.0 / float(hidden_dim) ** 0.5
            w1 = jax.random.uniform(k1, (input_dim, hidden_dim), dtype, -s1, s1)
            b1 = jax.random.uniform(k2, (1, hidden_dim), dtype, -s1, s1)
            w2 = jax.random.uniform(k3, (hidden_dim, nc), dtype, -s2, s2)
            b2 = jax.random.uniform(k4, (1, nc), dtype, -s2, s2)
            self.params.append((w1, b1, w2, b2))

        # ---- Fused, lane-padded parameters (built once, outside the kernel) ----
        L = len(self.num_classes)
        H_total = L * hidden_dim
        self.c_total = sum(self.num_classes)
        Hp = _round_up(H_total, _LANE)        # hidden concat padded to 128 lanes
        Cp = _round_up(self.c_total, _LANE)   # logits slab padded to 128 lanes

        w1c = jnp.zeros((input_dim, Hp), jnp.float32)
        b1c = jnp.zeros((1, Hp), jnp.float32)
        w2c = jnp.zeros((Hp, Cp), jnp.float32)    # block-diagonal
        b2c = jnp.zeros((1, Cp), jnp.float32)
        c_off = 0
        for lvl, (w1, b1, w2, b2) in enumerate(self.params):
            h0 = lvl * hidden_dim
            nc = self.num_classes[lvl]
            w1c = w1c.at[:, h0:h0 + hidden_dim].set(w1)
            b1c = b1c.at[:, h0:h0 + hidden_dim].set(b1)
            w2c = w2c.at[h0:h0 + hidden_dim, c_off:c_off + nc].set(w2)
            b2c = b2c.at[:, c_off:c_off + nc].set(b2)
            c_off += nc
        # Weight slabs in bf16 (MXU-native inputs, half the resident VMEM);
        # biases stay f32 (added after f32 accumulation).
        self.fused = (w1c.astype(jnp.bfloat16), b1c,
                      w2c.astype(jnp.bfloat16), b2c)

    def _fused_logits(self, x):
        return fused_hierarchical_head(x, *self.fused)

    def forward(self, x):
        # Returns a list of logits, one per hierarchy level (like the PyTorch module).
        slab = self._fused_logits(x)
        outs, off = [], 0
        for nc in self.num_classes:
            outs.append(slab[:, off:off + nc])
            off += nc
        return outs

    def get_embedding(self, x):
        # The fused slab is already the concatenation; just drop lane padding.
        return self._fused_logits(x)[:, :self.c_total]


def _reference_forward(x, params):
    # Pure-JAX f32 per-level reference.
    outs = []
    for w1, b1, w2, b2 in params:
        h = jnp.maximum(x @ w1 + b1, 0.0)
        outs.append(h @ w2 + b2)
    return outs


if __name__ == "__main__":
    key = jax.random.PRNGKey(0)
    kx, kx2, kp = jax.random.split(key, 3)

    batch, input_dim, hidden_dim = 8, 32, 32
    hierarchy_config = [
        {"num_classes": 4},
        {"num_classes": 8},
        {"num_classes": 16},
    ]

    x = jax.random.normal(kx, (batch, input_dim), dtype=jnp.float32)

    head = HierarchicalClassifierHead(input_dim, hierarchy_config,
                                      hidden_dim=hidden_dim, key=kp)

    outs = head.forward(x)
    outs = [jax.block_until_ready(o) for o in outs]

    # Correctness check vs pure-JAX f32 reference (loose tol: bf16 MXU inputs).
    refs = _reference_forward(x, head.params)
    for o, r, lvl in zip(outs, refs, hierarchy_config):
        assert o.shape == (batch, lvl["num_classes"]), (o.shape, lvl)
        assert jnp.allclose(o, r, atol=3e-2, rtol=3e-2), "mismatch vs reference"

    emb = jax.block_until_ready(head.get_embedding(x))
    total_c = sum(l["num_classes"] for l in hierarchy_config)
    assert emb.shape == (batch, total_c)
    assert jnp.allclose(emb, jnp.concatenate(refs, axis=-1),
                        atol=3e-2, rtol=3e-2), "embedding mismatch vs reference"

    # Non-divisible batch: partial last block (no jnp.pad of x); out-of-bounds
    # rows are computed on unspecified pad data and dropped by Pallas.
    b2_rows = 20
    x2 = jax.random.normal(kx2, (b2_rows, input_dim), dtype=jnp.float32)
    slab2 = jax.block_until_ready(
        fused_hierarchical_head(x2, *head.fused, max_bm=8))
    refs2 = jnp.concatenate(_reference_forward(x2, head.params), axis=-1)
    assert jnp.allclose(slab2[:, :total_c], refs2,
                        atol=3e-2, rtol=3e-2), "partial-block mismatch"

    print("KERNEL_OK")
</pallas_src>

<mosaic_0001>
module attributes {stable_mosaic.version = 11 : i64} {
  func.func @_fused_head_kernel(%arg0: i32, %arg1: memref<8x32xf32, #tpu.memory_space<vmem>>, %arg2: memref<32x128xbf16, #tpu.memory_space<vmem>>, %arg3: memref<1x128xf32, #tpu.memory_space<vmem>>, %arg4: memref<128x128xbf16, #tpu.memory_space<vmem>>, %arg5: memref<1x128xf32, #tpu.memory_space<vmem>>, %arg6: memref<8x128xf32, #tpu.memory_space<vmem>>) attributes {dimension_semantics = [#tpu.dimension_semantics<parallel>], iteration_bounds = array<i64: 1>, scalar_prefetch = 0 : i64, scratch_operands = 0 : i64, tpu.core_type = #tpu.core_type<tc>, window_params = [{transform_indices = @transform_0, window_bounds = array<i64: 8, 32>}, {pipeline_mode = #tpu.pipeline_mode<synchronous>, transform_indices = @transform_1, window_bounds = array<i64: 32, 128>}, {pipeline_mode = #tpu.pipeline_mode<synchronous>, transform_indices = @transform_2, window_bounds = array<i64: 1, 128>}, {pipeline_mode = #tpu.pipeline_mode<synchronous>, transform_indices = @transform_3, window_bounds = array<i64: 128, 128>}, {pipeline_mode = #tpu.pipeline_mode<synchronous>, transform_indices = @transform_4, window_bounds = array<i64: 1, 128>}, {transform_indices = @transform_5, window_bounds = array<i64: 8, 128>}]} {
    %c0 = arith.constant 0 : index
    %c0_0 = arith.constant 0 : index
    %0 = vector.load %arg1[%c0, %c0_0] : memref<8x32xf32, #tpu.memory_space<vmem>>, vector<8x32xf32>
    %1 = arith.truncf %0 : vector<8x32xf32> to vector<8x32xbf16>
    %c0_1 = arith.constant 0 : index
    %c0_2 = arith.constant 0 : index
    %2 = vector.load %arg2[%c0_1, %c0_2] : memref<32x128xbf16, #tpu.memory_space<vmem>>, vector<32x128xbf16>
    %cst = arith.constant dense<0.000000e+00> : vector<8x128xf32>
    %3 = tpu.matmul %1, %2, %cst {dimension_numbers = #tpu.dot_dimension_numbers<[1], [0], [0], [1], [0, 0, 1, 1], [], []>} : vector<8x32xbf16>, vector<32x128xbf16>, vector<8x128xf32> -> vector<8x128xf32>
    %c0_3 = arith.constant 0 : index
    %c0_4 = arith.constant 0 : index
    %4 = vector.load %arg3[%c0_3, %c0_4] : memref<1x128xf32, #tpu.memory_space<vmem>>, vector<1x128xf32>
    %5 = vector.broadcast %4 : vector<1x128xf32> to vector<8x128xf32>
    %6 = arith.addf %3, %5 : vector<8x128xf32>
    %cst_5 = arith.constant 0.000000e+00 : f32
    %7 = vector.broadcast %cst_5 : f32 to vector<8x128xf32>
    %8 = arith.maximumf %6, %7 : vector<8x128xf32>
    %9 = arith.truncf %8 : vector<8x128xf32> to vector<8x128xbf16>
    %c0_6 = arith.constant 0 : index
    %c0_7 = arith.constant 0 : index
    %10 = vector.load %arg4[%c0_6, %c0_7] : memref<128x128xbf16, #tpu.memory_space<vmem>>, vector<128x128xbf16>
    %cst_8 = arith.constant dense<0.000000e+00> : vector<8x128xf32>
    %11 = tpu.matmul %9, %10, %cst_8 {dimension_numbers = #tpu.dot_dimension_numbers<[1], [0], [0], [1], [0, 0, 1, 1], [], []>} : vector<8x128xbf16>, vector<128x128xbf16>, vector<8x128xf32> -> vector<8x128xf32>
    %c0_9 = arith.constant 0 : index
    %c0_10 = arith.constant 0 : index
    %12 = vector.load %arg5[%c0_9, %c0_10] : memref<1x128xf32, #tpu.memory_space<vmem>>, vector<1x128xf32>
    %13 = vector.broadcast %12 : vector<1x128xf32> to vector<8x128xf32>
    %14 = arith.addf %11, %13 : vector<8x128xf32>
    %c0_11 = arith.constant 0 : index
    %c0_12 = arith.constant 0 : index
    %15 = vector.load %arg6[%c0_11, %c0_12] : memref<8x128xf32, #tpu.memory_space<vmem>>, vector<8x128xf32>
    tpu.vector_store %arg6[%c0_11, %c0_12], %14 {strides = array<i32>} : memref<8x128xf32, #tpu.memory_space<vmem>>, vector<8x128xf32>,
    return
  }
  func.func @transform_0(%arg0: i32) -> (i32, i32) {
    %c0_i32 = arith.constant 0 : i32
    %c0_i32_0 = arith.constant 0 : i32
    return %arg0, %c0_i32 : i32, i32
  }
  func.func @transform_1(%arg0: i32) -> (i32, i32) {
    %c0_i32 = arith.constant 0 : i32
    %c0_i32_0 = arith.constant 0 : i32
    %c0_i32_1 = arith.constant 0 : i32
    return %c0_i32, %c0_i32_0 : i32, i32
  }
  func.func @transform_2(%arg0: i32) -> (i32, i32) {
    %c0_i32 = arith.constant 0 : i32
    %c0_i32_0 = arith.constant 0 : i32
    %c0_i32_1 = arith.constant 0 : i32
    return %c0_i32, %c0_i32_0 : i32, i32
  }
  func.func @transform_3(%arg0: i32) -> (i32, i32) {
    %c0_i32 = arith.constant 0 : i32
    %c0_i32_0 = arith.constant 0 : i32
    %c0_i32_1 = arith.constant 0 : i32
    return %c0_i32, %c0_i32_0 : i32, i32
  }
  func.func @transform_4(%arg0: i32) -> (i32, i32) {
    %c0_i32 = arith.constant 0 : i32
    %c0_i32_0 = arith.constant 0 : i32
    %c0_i32_1 = arith.constant 0 : i32
    return %c0_i32, %c0_i32_0 : i32, i32
  }
  func.func @transform_5(%arg0: i32) -> (i32, i32) {
    %c0_i32 = arith.constant 0 : i32
    %c0_i32_0 = arith.constant 0 : i32
    return %arg0, %c0_i32 : i32, i32
  }
}

</mosaic_0001>

<llo_original>
// kernel: tpu_custom_call.1
$region0: #{tpu_custom_call.1}
  #allocation0 [shape = 'u32[]', space=smem, size = 0x4, offset = 0x4, fixed_abs, tag = 'smem constant byte address 0x4 - core index']
  #allocation1 [shape = 'u32[144,128]{1,0:T(1,128)}', space=vmem, size = 0x12000, scoped, tag = 'internal scratch']
  %s0 = inlined_call_operand.hbm [shape: f32[8,32], index: 0, kind: input, shape index: {}]
  %s1 = inlined_call_operand.hbm [shape: bf16[32,128], index: 1, kind: input, shape index: {}]
  %s2 = inlined_call_operand.vmem [shape: f32[1,128], index: 2, kind: input, shape index: {}]
  %s3 = inlined_call_operand.hbm [shape: bf16[128,128], index: 3, kind: input, shape index: {}]
  %s4 = inlined_call_operand.vmem [shape: f32[1,128], index: 4, kind: input, shape index: {}]
  %s5 = inlined_call_operand.hbm [shape: f32[8,128], index: 5, kind: output, shape index: {}]
  %s6 = sld [smem:[#allocation0]]
  $region42: #{tpu_custom_call.1} parent=0
    _
  %s8 = ssub.s32 1, %s6
  %s9 = scalar_select 0, %s8, %s6
  $region1: #{tpu_custom_call.1} parent=0
    #allocation2 [shape = 'u8[4096]{0}', space=vmem, size = 0x1000, scoped, tag = 'input window, operand 0, single buffered']
    #allocation3 [shape = 's32[1]{0}', space=sflag, size = 0x4, scoped, tag = 'scoped memory for tpu_custom_call.1']
    #allocation4 [shape = 's32[1]{0}', space=sflag, size = 0x4, scoped, tag = 'scoped memory for tpu_custom_call.1']
    #allocation5 [shape = 'u8[8192]{0}', space=vmem, size = 0x2000, scoped, tag = 'input window, operand 1, single buffered']
    #allocation6 [shape = 's32[1]{0}', space=sflag, size = 0x4, scoped, tag = 'scoped memory for tpu_custom_call.1']
    #allocation7 [shape = 'u8[32768]{0}', space=vmem, size = 0x8000, scoped, tag = 'input window, operand 3, single buffered']
    #allocation8 [shape = 'u8[4096]{0}', space=vmem, size = 0x1000, scoped, tag = 'output window, operand 0, single buffered']
    %10 = vsyncpa [#allocation3], 0
    %11 = vsyncpa [#allocation6], 0
    %12 = vsyncpa [#allocation4], 0
    // Predicated region
    $region2: #{tpu_custom_call.1} parent=1 // pred_check
      _
    $region3: #{tpu_custom_call.1} parent=1 // pred_check_branch
      %14 = sbr.rel (0) target = $region5
    $region4: #{tpu_custom_call.1} parent=1 // pred_region
      %s16 = ssub.s32 128, 128
      %17 = vsyncadd [#allocation3], %s16
      %s19 = sshll.u32 [#allocation2], 4
      %s20 = int_to_ptr.vmem [resolvable:$true] %s19
      %22 = dma.hbm_to_vmem [thread:$0]  %s0, 128, %s20, [#allocation3]
    $region5: #{tpu_custom_call.1} parent=1 // pred_fallthru
      _
    // Predicated region
    $region6: #{tpu_custom_call.1} parent=1 // pred_check
      _
    $region7: #{tpu_custom_call.1} parent=1 // pred_check_branch
      %24 = sbr.rel (0) target = $region9
    $region8: #{tpu_custom_call.1} parent=1 // pred_region
      %s26 = ssub.s32 256, 256
      %27 = vsyncadd [#allocation6], %s26
      %s28 = sshll.u32 [#allocation5], 4
      %s29 = int_to_ptr.vmem [resolvable:$true] %s28
      %34 = dma.hbm_to_vmem [thread:$0]  %s1, 256, %s29, [#allocation6], 64, 64, 4
    $region9: #{tpu_custom_call.1} parent=1 // pred_fallthru
      _
    // Predicated region
    $region10: #{tpu_custom_call.1} parent=1 // pred_check
      _
    $region11: #{tpu_custom_call.1} parent=1 // pred_check_branch
      %36 = sbr.rel (0) target = $region13
    $region12: #{tpu_custom_call.1} parent=1 // pred_region
      _
    $region13: #{tpu_custom_call.1} parent=1 // pred_fallthru
      _
    // Predicated region
    $region14: #{tpu_custom_call.1} parent=1 // pred_check
      _
    $region15: #{tpu_custom_call.1} parent=1 // pred_check_branch
      %38 = sbr.rel (0) target = $region17
    $region16: #{tpu_custom_call.1} parent=1 // pred_region
      %s40 = ssub.s32 1024, 1024
      %41 = vsyncadd [#allocation6], %s40
      %s42 = sshll.u32 [#allocation7], 4
      %s43 = int_to_ptr.vmem [resolvable:$true] %s42
      %48 = dma.hbm_to_vmem [thread:$0]  %s3, 1024, %s43, [#allocation6], 64, 64, 4
    $region17: #{tpu_custom_call.1} parent=1 // pred_fallthru
      _
    // Predicated region
    $region18: #{tpu_custom_call.1} parent=1 // pred_check
      _
    $region19: #{tpu_custom_call.1} parent=1 // pred_check_branch
      %50 = sbr.rel (0) target = $region21
    $region20: #{tpu_custom_call.1} parent=1 // pred_region
      _
    $region21: #{tpu_custom_call.1} parent=1 // pred_fallthru
      _
    // Predicated region
    $region22: #{tpu_custom_call.1} parent=1 // pred_check
      _
    $region23: #{tpu_custom_call.1} parent=1 // pred_check_branch
      %52 = sbr.rel (0) target = $region25
    $region24: #{tpu_custom_call.1} parent=1 // pred_region
      %53 = dma.done [#allocation3], 128
    $region25: #{tpu_custom_call.1} parent=1 // pred_fallthru
      _
    // Predicated region
    $region26: #{tpu_custom_call.1} parent=1 // pred_check
      _
    $region27: #{tpu_custom_call.1} parent=1 // pred_check_branch
      %55 = sbr.rel (0) target = $region29
    $region28: #{tpu_custom_call.1} parent=1 // pred_region
      %56 = dma.done [#allocation6], 256
    $region29: #{tpu_custom_call.1} parent=1 // pred_fallthru
      _
    // Predicated region
    $region30: #{tpu_custom_call.1} parent=1 // pred_check
      _
    $region31: #{tpu_custom_call.1} parent=1 // pred_check_branch
      %58 = sbr.rel (0) target = $region33
    $region32: #{tpu_custom_call.1} parent=1 // pred_region
      %59 = dma.done [#allocation6], 1024
    $region33: #{tpu_custom_call.1} parent=1 // pred_fallthru
      _
    %v61 = vld [vmem:[#allocation2] sm:$0xff]
    %v62 = vpack.c.bf16 %v61, %v61
    %v63 = vld [vmem:[#allocation5] sm:$0xf]
    %v64 = vld [vmem:[#allocation5 + $0x4] sm:$0xf]
    %v65 = vld [vmem:[#allocation5 + $0x8] sm:$0xf]
    %v66 = vld [vmem:[#allocation5 + $0xc] sm:$0xf]
    %v67 = vld [vmem:[%s2] sm:$0x1]
    %v69 = vlaneseq
    %v70 = vshrl.u32 %v69, 7
    %v71 = vsub.s32 0, %v70
    %v72 = vrot.slane %v67, %v71
    %v78 = vunpack.c.l.b16 %v63
    %v79 = vunpack.c.l.b16 %v64
    %v80 = vunpack.c.l.b16 %v65
    %v81 = vunpack.c.l.b16 %v66
    %v82 = vpack.c.b16 %v79, %v78
    %v83 = vpack.c.b16 %v81, %v80
    %vm86 = vcmask 261120
    %v88 = vsel %vm86, %v62, 0
    %90 = vmatprep.subr.bf16.mxu0 0
    %91 = vmatpush1.bf16.msra.mxu0 0
    %92 = vmatprep.subr.bf16.mxu0 0
    %93 = vmatpush1.bf16.msra.mxu0 0
    %94 = vmatprep.subr.bf16.mxu0 0
    %95 = vmatpush1.bf16.msra.mxu0 0
    %96 = vmatprep.subr.bf16.mxu0 0
    %97 = vmatpush1.bf16.msra.mxu0 0
    %98 = vmatprep.subr.bf16.mxu0 0
    %99 = vmatpush1.bf16.msra.mxu0 0
    %100 = vmatprep.subr.bf16.mxu0 0
    %101 = vmatpush1.bf16.msra.mxu0 0
    %102 = vmatprep.subr.bf16.mxu0 0
    %103 = vmatpush1.bf16.msra.mxu0 %v83
    %104 = vmatprep.subr.bf16.mxu0 0
    %105 = vmatpush1.bf16.msra.mxu0 %v82
    %106 = vmatprep.subr.bf16.mxu0 0
    %107 = vmatpush2.bf16.msra.mxu0 0
    %108 = vmatprep.subr.bf16.mxu0 0
    %109 = vmatpush2.bf16.msra.mxu0 0
    %110 = vmatprep.subr.bf16.mxu0 0
    %111 = vmatpush2.bf16.msra.mxu0 0
    %112 = vmatprep.subr.bf16.mxu0 0
    %113 = vmatpush2.bf16.msra.mxu0 0
    %114 = vmatprep.subr.bf16.mxu0 0
    %115 = vmatpush2.bf16.msra.mxu0 0
    %116 = vmatprep.subr.bf16.mxu0 0
    %117 = vmatpush2.bf16.msra.mxu0 0
    %118 = vmatprep.subr.bf16.mxu0 0
    %119 = vmatpush2.bf16.msra.mxu0 0
    %120 = vmatprep.subr.bf16.mxu0 0
    %121 = vmatpush2.bf16.msra.mxu0 0
    %122 = vmatprep.mubr.bf16.mxu0 0
    %123 = vmatmul.mubr.bf16.gmra.mxu0 %v88
    %v124 = vpop.f32.mrf.mxu0
    %v125 = vadd.f32 %v72, %v124
    %v126 = vpop.f32.mrf.mxu0
    %v127 = vpop.f32.mrf.mxu0
    %v128 = vpop.f32.mrf.mxu0
    %129 = vdwg.mxu0
    %v130 = vmax.f32 %v125, 0.0
    %v131 = vpack.c.bf16 %v130, %v130
    %v132 = vld [vmem:[#allocation7] sm:$0xf]
    %v133 = vld [vmem:[#allocation7 + $0x4] sm:$0xf]
    %v134 = vld [vmem:[#allocation7 + $0x8] sm:$0xf]
    %v135 = vld [vmem:[#allocation7 + $0xc] sm:$0xf]
    %v136 = vld [vmem:[#allocation7 + $0x10] sm:$0xf]
    %v137 = vld [vmem:[#allocation7 + $0x14] sm:$0xf]
    %v138 = vld [vmem:[#allocation7 + $0x18] sm:$0xf]
    %v139 = vld [vmem:[#allocation7 + $0x1c] sm:$0xf]
    %v140 = vld [vmem:[#allocation7 + $0x20] sm:$0xf]
    %v141 = vld [vmem:[#allocation7 + $0x24] sm:$0xf]
    %v142 = vld [vmem:[#allocation7 + $0x28] sm:$0xf]
    %v143 = vld [vmem:[#allocation7 + $0x2c] sm:$0xf]
    %v144 = vld [vmem:[#allocation7 + $0x30] sm:$0xf]
    %v145 = vld [vmem:[#allocation7 + $0x34] sm:$0xf]
    %v146 = vld [vmem:[#allocation7 + $0x38] sm:$0xf]
    %v147 = vld [vmem:[#allocation7 + $0x3c] sm:$0xf]
    %v148 = vld [vmem:[%s4] sm:$0x1]
    %v150 = vlaneseq
    %v151 = vshrl.u32 %v150, 7
    %v152 = vsub.s32 0, %v151
    %v153 = vrot.slane %v148, %v152
    %v171 = vunpack.c.l.b16 %v132
    %v172 = vunpack.c.l.b16 %v133
    %v173 = vunpack.c.l.b16 %v134
    %v174 = vunpack.c.l.b16 %v135
    %v175 = vunpack.c.l.b16 %v136
    %v176 = vunpack.c.l.b16 %v137
    %v177 = vunpack.c.l.b16 %v138
    %v178 = vunpack.c.l.b16 %v139
    %v179 = vunpack.c.l.b16 %v140
    %v180 = vunpack.c.l.b16 %v141
    %v181 = vunpack.c.l.b16 %v142
    %v182 = vunpack.c.l.b16 %v143
    %v183 = vunpack.c.l.b16 %v144
    %v184 = vunpack.c.l.b16 %v145
    %v185 = vunpack.c.l.b16 %v146
    %v186 = vunpack.c.l.b16 %v147
    %v187 = vpack.c.b16 %v172, %v171
    %v188 = vpack.c.b16 %v174, %v173
    %v189 = vpack.c.b16 %v176, %v175
    %v190 = vpack.c.b16 %v178, %v177
    %v191 = vpack.c.b16 %v180, %v179
    %v192 = vpack.c.b16 %v182, %v181
    %v193 = vpack.c.b16 %v184, %v183
    %v194 = vpack.c.b16 %v186, %v185
    %203 = vmatprep.subr.bf16.mxu0 0
    %204 = vmatpush1.bf16.msra.mxu0 %v194
    %205 = vmatprep.subr.bf16.mxu0 0
    %206 = vmatpush1.bf16.msra.mxu0 %v193
    %207 = vmatprep.subr.bf16.mxu0 0
    %208 = vmatpush1.bf16.msra.mxu0 %v192
    %209 = vmatprep.subr.bf16.mxu0 0
    %210 = vmatpush1.bf16.msra.mxu0 %v191
    %211 = vmatprep.subr.bf16.mxu0 0
    %212 = vmatpush1.bf16.msra.mxu0 %v190
    %213 = vmatprep.subr.bf16.mxu0 0
    %214 = vmatpush1.bf16.msra.mxu0 %v189
    %215 = vmatprep.subr.bf16.mxu0 0
    %216 = vmatpush1.bf16.msra.mxu0 %v188
    %217 = vmatprep.subr.bf16.mxu0 0
    %218 = vmatpush1.bf16.msra.mxu0 %v187
    %219 = vmatprep.subr.bf16.mxu0 0
    %220 = vmatpush2.bf16.msra.mxu0 0
    %221 = vmatprep.subr.bf16.mxu0 0
    %222 = vmatpush2.bf16.msra.mxu0 0
    %223 = vmatprep.subr.bf16.mxu0 0
    %224 = vmatpush2.bf16.msra.mxu0 0
    %225 = vmatprep.subr.bf16.mxu0 0
    %226 = vmatpush2.bf16.msra.mxu0 0
    %227 = vmatprep.subr.bf16.mxu0 0
    %228 = vmatpush2.bf16.msra.mxu0 0
    %229 = vmatprep.subr.bf16.mxu0 0
    %230 = vmatpush2.bf16.msra.mxu0 0
    %231 = vmatprep.subr.bf16.mxu0 0
    %232 = vmatpush2.bf16.msra.mxu0 0
    %233 = vmatprep.subr.bf16.mxu0 0
    %234 = vmatpush2.bf16.msra.mxu0 0
    %235 = vmatprep.mubr.bf16.mxu0 0
    %236 = vmatmul.mubr.bf16.gmra.mxu0 %v131
    %v237 = vpop.f32.mrf.mxu0
    %v238 = vadd.f32 %v153, %v237
    %v239 = vpop.f32.mrf.mxu0
    %v240 = vpop.f32.mrf.mxu0
    %v241 = vpop.f32.mrf.mxu0
    %242 = vdwg.mxu0
    %243 = vst [vmem:[#allocation8] sm:$0xff] %v238
    // Predicated region
    $region34: #{tpu_custom_call.1} parent=1 // pred_check
      _
    $region35: #{tpu_custom_call.1} parent=1 // pred_check_branch
      %245 = sbr.rel (0) target = $region37
    $region36: #{tpu_custom_call.1} parent=1 // pred_region
      %s247 = ssub.s32 128, 128
      %248 = vsyncadd [#allocation4], %s247
      %s250 = sshll.u32 [#allocation8], 4
      %s251 = int_to_ptr.vmem [resolvable:$true] %s250
      %253 = dma.vmem_to_hbm [thread:$0]  %s251, 128, %s5, [#allocation4]
    $region37: #{tpu_custom_call.1} parent=1 // pred_fallthru
      _
    // Predicated region
    $region38: #{tpu_custom_call.1} parent=1 // pred_check
      _
    $region39: #{tpu_custom_call.1} parent=1 // pred_check_branch
      %255 = sbr.rel (0) target = $region41
    $region40: #{tpu_custom_call.1} parent=1 // pred_region
      %256 = dma.done [#allocation4], 128
    $region41: #{tpu_custom_call.1} parent=1 // pred_fallthru
      _
    %257 = vsyncpa [#allocation3], 1
    %258 = vsyncpa [#allocation6], 1
    %259 = vsyncpa [#allocation4], 1

</llo_original>
